<compile_context>
chip_gen: v7x
topology: tpu7x:2x2x1
jax: 0.10.0
libtpu: 0.0.40
codegen_flags: <defaults>
</compile_context>

<pallas_src>
import functools

import jax
import jax.numpy as jnp
from jax.experimental import pallas as pl
from jax.experimental.pallas import tpu as pltpu

LANE = 128  # TPU vreg lane width; feature/class dims are padded to this.


def _round_up(x, m):
    return ((x + m - 1) // m) * m


def _pad_to(arr, shape):
    """Zero-pad `arr` up to `shape` (trailing padding on every axis)."""
    pads = [(0, t - s) for s, t in zip(arr.shape, shape)]
    if all(p == (0, 0) for p in pads):
        return arr
    return jnp.pad(arr, pads)


# ---------------------------------------------------------------------------
# Fused path: both GraphConv layers in ONE kernel, dense A_hat resident in
# VMEM.  Right regime for small/medium graphs where launch + DMA overhead
# dominates and A_hat fits comfortably in scoped VMEM.
# ---------------------------------------------------------------------------
def _gcn_fused_kernel(a_ref, x_ref, w1_ref, b1_ref, w2_ref, b2_ref, o_ref, *,
                      l1_aggregate_first, l2_transform_first):
    """a: [N,N] bf16, x: [N,Fin] bf16, w1: [Fin,Hp] f32, b1: [1,Hp] f32,
    w2: [Hp,Cp] f32, b2: [1,Cp] f32, o: [N,Cp] f32.

    Contraction order per layer is a compile-time choice so that the N^2-sized
    matmul always contracts against the narrower feature dimension.
    """
    a = a_ref[...]                                          # bf16 (MXU-native)
    x = x_ref[...]                                          # bf16

    # ---- layer 1: A @ X @ W1 + b1, ReLU -----------------------------------
    if l1_aggregate_first:                                  # (A @ X) @ W1
        ax = jnp.dot(a, x, preferred_element_type=jnp.float32)      # [N, Fin]
        h1 = jnp.dot(ax, w1_ref[...], preferred_element_type=jnp.float32)
    else:                                                   # A @ (X @ W1)
        xw = jnp.dot(x.astype(jnp.float32), w1_ref[...],
                     preferred_element_type=jnp.float32)             # [N, Hp]
        h1 = jnp.dot(a, xw.astype(a.dtype), preferred_element_type=jnp.float32)
    h1 = jnp.maximum(h1 + b1_ref[...], 0.0)                 # [N, Hp] f32

    # ---- layer 2: A @ H1 @ W2 + b2 -----------------------------------------
    if l2_transform_first:                                  # A @ (H1 @ W2)
        hw = jnp.dot(h1, w2_ref[...], preferred_element_type=jnp.float32)
        out = jnp.dot(a, hw.astype(a.dtype), preferred_element_type=jnp.float32)
    else:                                                   # (A @ H1) @ W2
        ah = jnp.dot(a, h1.astype(a.dtype), preferred_element_type=jnp.float32)
        out = jnp.dot(ah, w2_ref[...], preferred_element_type=jnp.float32)
    o_ref[...] = (out + b2_ref[...]).astype(o_ref.dtype)


def _padded_params(params, fin):
    h_feats = params["w1"].shape[1]
    num_classes = params["w2"].shape[1]
    hp = _round_up(h_feats, LANE)
    cp = _round_up(num_classes, LANE)
    w1p = _pad_to(params["w1"].astype(jnp.float32), (fin, hp))
    b1p = _pad_to(params["b1"].astype(jnp.float32).reshape(1, -1), (1, hp))
    w2p = _pad_to(params["w2"].astype(jnp.float32), (hp, cp))
    b2p = _pad_to(params["b2"].astype(jnp.float32).reshape(1, -1), (1, cp))
    return w1p, b1p, w2p, b2p, hp, cp, num_classes


def gcn_forward_fused(a_hat, x, params):
    n, fin = x.shape
    w1p, b1p, w2p, b2p, hp, cp, num_classes = _padded_params(params, fin)

    a_bf16 = a_hat.astype(jnp.bfloat16)    # halves the dominant A_hat traffic
    x_bf16 = x.astype(jnp.bfloat16)        # halves X traffic

    # The N^2 matmuls should contract against the narrower feature dim.
    l1_aggregate_first = fin <= hp          # (A@X)@W1 if Fin is the narrow one
    l2_transform_first = cp <= hp           # A@(H@W2) if Cp is the narrow one

    flops = (2 * n * n * min(fin, hp) + 2 * n * fin * hp      # layer 1
             + 2 * n * hp * cp + 2 * n * n * min(hp, cp))     # layer 2
    bytes_accessed = (a_bf16.size * 2 + x_bf16.size * 2
                      + (w1p.size + b1p.size + w2p.size + b2p.size) * 4
                      + n * cp * 4)

    # Resident VMEM footprint: A_hat (bf16) + x (bf16) + live intermediates
    # (h1 [N,Hp] f32 + one of ax/hw) + out + weights.
    vmem_bytes = (2 * n * n + 2 * n * fin
                  + 4 * n * (hp + max(fin, cp) + cp)
                  + 4 * (fin * hp + hp * cp + hp + cp))
    compiler_params = None
    if vmem_bytes > 12 * 2**20:
        # Raise the scoped-VMEM limit (only 16 MiB by default on v5e, 32 MiB
        # on v6e/v7x).  Graphs beyond ~half of physical VMEM (64 MiB on v7x)
        # should use gcn_forward_tiled instead.
        compiler_params = pltpu.CompilerParams(
            vmem_limit_bytes=min(int(1.5 * vmem_bytes), 96 * 2**20))

    kernel = functools.partial(_gcn_fused_kernel,
                               l1_aggregate_first=l1_aggregate_first,
                               l2_transform_first=l2_transform_first)

    out_padded = pl.pallas_call(
        kernel,
        out_shape=jax.ShapeDtypeStruct((n, cp), jnp.float32),
        in_specs=[pl.BlockSpec(memory_space=pltpu.MemorySpace.VMEM)] * 6,
        out_specs=pl.BlockSpec(memory_space=pltpu.MemorySpace.VMEM),
        cost_estimate=pl.CostEstimate(flops=flops, transcendentals=0,
                                      bytes_accessed=bytes_accessed),
        compiler_params=compiler_params,
    )(a_bf16, x_bf16, w1p, b1p, w2p, b2p)

    return out_padded[:, :num_classes]


# ---------------------------------------------------------------------------
# Tiled per-layer path for graphs whose dense A_hat does not fit VMEM.
# grid = (row blocks [parallel], reduction blocks [arbitrary, last]).
# ---------------------------------------------------------------------------
def _gcn_layer_tiled_kernel(a_ref, x_ref, w_ref, b_ref, o_ref, acc_ref, *,
                            apply_relu):
    """o[i,:] = act( (sum_k A[i,k] @ X[k]) @ W + b )  (aggregate-then-transform).

    a_ref: [TM, TK] bf16, x_ref: [TK, Fin] bf16, w_ref: [Fin, Fout] f32,
    b_ref: [1, Fout] f32, o_ref: [TM, Fout], acc_ref: [TM, Fin] f32 scratch.
    """
    k = pl.program_id(1)

    @pl.when(k == 0)
    def _():
        acc_ref[...] = jnp.zeros_like(acc_ref)

    # Neighbour aggregation first: contracts against the narrow Fin (bf16 MXU,
    # f32 accumulation).
    acc_ref[...] += jnp.dot(a_ref[...], x_ref[...],
                            preferred_element_type=jnp.float32)

    @pl.when(k == pl.num_programs(1) - 1)
    def _():
        h = jnp.dot(acc_ref[...], w_ref[...],
                    preferred_element_type=jnp.float32) + b_ref[...]
        if apply_relu:
            h = jnp.maximum(h, 0.0)
        o_ref[...] = h.astype(o_ref.dtype)


def _pick_tile(n):
    for t in (1024, 512, 256, 128):
        if n % t == 0:
            return t
    raise ValueError("tiled GCN path requires N to be a multiple of 128")


def gcn_layer_tiled(a_hat, x, w, b, *, apply_relu, out_dtype, tm=None, tk=None):
    n, fin = x.shape
    fout = w.shape[1]
    tm = tm or min(_pick_tile(n), 512)
    tk = tk or min(_pick_tile(n), 512)
    assert n % tm == 0 and n % tk == 0

    a_bf16 = a_hat.astype(jnp.bfloat16)
    x_bf16 = x.astype(jnp.bfloat16)

    flops = 2 * n * n * fin + 2 * n * fin * fout
    bytes_accessed = (a_bf16.size * 2 + x_bf16.size * 2 + (w.size + b.size) * 4
                      + n * fout * jnp.dtype(out_dtype).itemsize)

    kernel = functools.partial(_gcn_layer_tiled_kernel, apply_relu=apply_relu)
    return pl.pallas_call(
        kernel,
        out_shape=jax.ShapeDtypeStruct((n, fout), out_dtype),
        grid_spec=pltpu.PrefetchScalarGridSpec(
            num_scalar_prefetch=0,
            grid=(n // tm, n // tk),
            in_specs=[
                pl.BlockSpec((tm, tk), lambda i, k: (i, k)),      # A_hat tile
                pl.BlockSpec((tk, fin), lambda i, k: (k, 0)),     # X row strip
                pl.BlockSpec((fin, fout), lambda i, k: (0, 0)),   # W (resident)
                pl.BlockSpec((1, fout), lambda i, k: (0, 0)),     # b (resident)
            ],
            out_specs=pl.BlockSpec((tm, fout), lambda i, k: (i, 0)),
            scratch_shapes=[pltpu.VMEM((tm, fin), jnp.float32)],
        ),
        compiler_params=pltpu.CompilerParams(
            dimension_semantics=("parallel", "arbitrary")),
        cost_estimate=pl.CostEstimate(flops=flops, transcendentals=0,
                                      bytes_accessed=bytes_accessed),
    )(a_bf16, x_bf16, w.astype(jnp.float32), b.astype(jnp.float32))


def gcn_forward_tiled(a_hat, x, params, *, tm=None, tk=None):
    n, fin = x.shape
    w1p, b1p, w2p, b2p, hp, cp, num_classes = _padded_params(params, fin)
    # Layer 1 -> ReLU.  Intermediate kept lane-dense (Hp = 128 multiple) and in
    # bf16 so layer 2's aggregation reads half the bytes.
    h1 = gcn_layer_tiled(a_hat, x, w1p, b1p, apply_relu=True,
                         out_dtype=jnp.bfloat16, tm=tm, tk=tk)
    out = gcn_layer_tiled(a_hat, h1, w2p, b2p, apply_relu=False,
                          out_dtype=jnp.float32, tm=tm, tk=tk)
    return out[:, :num_classes]


def gcn_forward(a_hat, x, params):
    """GCN.forward: h = relu(conv1(g, x)); h = conv2(g, h)."""
    n, fin = x.shape
    hp = _round_up(params["w1"].shape[1], LANE)
    cp = _round_up(params["w2"].shape[1], LANE)
    fused_vmem = (2 * n * n + 2 * n * fin
                  + 4 * n * (hp + max(fin, cp) + cp)
                  + 4 * (fin * hp + hp * cp))
    # Fully fused single-launch kernel while the whole graph fits comfortably
    # in scoped VMEM on every generation; otherwise tiled per-layer path.
    if fused_vmem <= 12 * 2**20 or n % 128 != 0:
        return gcn_forward_fused(a_hat, x, params)
    return gcn_forward_tiled(a_hat, x, params)


# ---------------------------------------------------------------------------
# Parameter / graph construction (host side, deterministic).
# ---------------------------------------------------------------------------
def init_params(key, in_feats, h_feats, num_classes):
    k1, k2 = jax.random.split(key)

    def xavier(k, fan_in, fan_out):  # matches DGL GraphConv init; zero bias
        limit = jnp.sqrt(6.0 / (fan_in + fan_out))
        return jax.random.uniform(k, (fan_in, fan_out), jnp.float32,
                                  minval=-limit, maxval=limit)

    return {
        "w1": xavier(k1, in_feats, h_feats),
        "b1": jnp.zeros((1, h_feats), jnp.float32),
        "w2": xavier(k2, h_feats, num_classes),
        "b2": jnp.zeros((1, num_classes), jnp.float32),
    }


def build_normalized_adjacency(key, n):
    """Random undirected graph + self loops, symmetric normalization."""
    # TODO(synk): the DGL graph object is represented here as its dense
    # symmetrically-normalized adjacency; sparse message passing is not
    # translated.
    logits = jax.random.uniform(key, (n, n))
    adj = (logits > 0.8).astype(jnp.float32)
    adj = jnp.maximum(adj, adj.T)                            # undirected
    adj = jnp.maximum(adj, jnp.eye(n, dtype=jnp.float32))    # self loops
    deg = jnp.sum(adj, axis=1)
    d_inv_sqrt = 1.0 / jnp.sqrt(deg)
    return adj * d_inv_sqrt[:, None] * d_inv_sqrt[None, :]


if __name__ == "__main__":
    key = jax.random.PRNGKey(0)
    k_graph, k_feat, k_param, k_graph2, k_feat2 = jax.random.split(key, 5)

    IN_FEATS, H_FEATS, NUM_CLASSES = 16, 32, 8
    params = init_params(k_param, IN_FEATS, H_FEATS, NUM_CLASSES)

    def reference(a_hat, x, p):  # pure-JAX reference for correctness check
        h = jnp.maximum(a_hat @ (x @ p["w1"]) + p["b1"], 0.0)
        return a_hat @ (h @ p["w2"]) + p["b2"]

    # ---- small graph: fully fused single-kernel path ----------------------
    N1 = 64
    a1 = build_normalized_adjacency(k_graph, N1)
    x1 = jax.random.normal(k_feat, (N1, IN_FEATS), jnp.float32)
    out1 = jax.block_until_ready(gcn_forward(a1, x1, params))
    assert out1.shape == (N1, NUM_CLASSES)
    ref1 = reference(a1, x1, params)
    assert jnp.allclose(out1, ref1, atol=1e-1, rtol=1e-1), float(
        jnp.max(jnp.abs(out1 - ref1)))

    # ---- larger graph: tiled per-layer path (2x2 grid, parallel rows) -----
    N2 = 256
    a2 = build_normalized_adjacency(k_graph2, N2)
    x2 = jax.random.normal(k_feat2, (N2, IN_FEATS), jnp.float32)
    out2 = jax.block_until_ready(
        gcn_forward_tiled(a2, x2, params, tm=128, tk=128))
    assert out2.shape == (N2, NUM_CLASSES)
    ref2 = reference(a2, x2, params)
    assert jnp.allclose(out2, ref2, atol=1e-1, rtol=1e-1), float(
        jnp.max(jnp.abs(out2 - ref2)))

    print("KERNEL_OK")
</pallas_src>

<mosaic_0001>
module attributes {stable_mosaic.version = 11 : i64} {
  func.func @_gcn_fused_kernel(%arg0: memref<64x64xbf16, #tpu.memory_space<vmem>>, %arg1: memref<64x16xbf16, #tpu.memory_space<vmem>>, %arg2: memref<16x128xf32, #tpu.memory_space<vmem>>, %arg3: memref<1x128xf32, #tpu.memory_space<vmem>>, %arg4: memref<128x128xf32, #tpu.memory_space<vmem>>, %arg5: memref<1x128xf32, #tpu.memory_space<vmem>>, %arg6: memref<64x128xf32, #tpu.memory_space<vmem>>) attributes {dimension_semantics = [], scalar_prefetch = 0 : i64, scratch_operands = 0 : i64, tpu.core_type = #tpu.core_type<tc>} {
    %c0 = arith.constant 0 : index
    %c0_0 = arith.constant 0 : index
    %0 = vector.load %arg0[%c0, %c0_0] : memref<64x64xbf16, #tpu.memory_space<vmem>>, vector<64x64xbf16>
    %c0_1 = arith.constant 0 : index
    %c0_2 = arith.constant 0 : index
    %1 = vector.load %arg1[%c0_1, %c0_2] : memref<64x16xbf16, #tpu.memory_space<vmem>>, vector<64x16xbf16>
    %cst = arith.constant dense<0.000000e+00> : vector<64x16xf32>
    %2 = tpu.matmul %0, %1, %cst {dimension_numbers = #tpu.dot_dimension_numbers<[1], [0], [0], [1], [0, 0, 1, 1], [], []>} : vector<64x64xbf16>, vector<64x16xbf16>, vector<64x16xf32> -> vector<64x16xf32>
    %c0_3 = arith.constant 0 : index
    %c0_4 = arith.constant 0 : index
    %3 = vector.load %arg2[%c0_3, %c0_4] : memref<16x128xf32, #tpu.memory_space<vmem>>, vector<16x128xf32>
    %cst_5 = arith.constant dense<0.000000e+00> : vector<64x128xf32>
    %4 = tpu.matmul %2, %3, %cst_5 {dimension_numbers = #tpu.dot_dimension_numbers<[1], [0], [0], [1], [0, 0, 1, 1], [], []>} : vector<64x16xf32>, vector<16x128xf32>, vector<64x128xf32> -> vector<64x128xf32>
    %c0_6 = arith.constant 0 : index
    %c0_7 = arith.constant 0 : index
    %5 = vector.load %arg3[%c0_6, %c0_7] : memref<1x128xf32, #tpu.memory_space<vmem>>, vector<1x128xf32>
    %6 = vector.broadcast %5 : vector<1x128xf32> to vector<64x128xf32>
    %7 = arith.addf %4, %6 : vector<64x128xf32>
    %cst_8 = arith.constant 0.000000e+00 : f32
    %8 = vector.broadcast %cst_8 : f32 to vector<64x128xf32>
    %9 = arith.maximumf %7, %8 : vector<64x128xf32>
    %c0_9 = arith.constant 0 : index
    %c0_10 = arith.constant 0 : index
    %10 = vector.load %arg4[%c0_9, %c0_10] : memref<128x128xf32, #tpu.memory_space<vmem>>, vector<128x128xf32>
    %cst_11 = arith.constant dense<0.000000e+00> : vector<64x128xf32>
    %11 = tpu.matmul %9, %10, %cst_11 {dimension_numbers = #tpu.dot_dimension_numbers<[1], [0], [0], [1], [0, 0, 1, 1], [], []>} : vector<64x128xf32>, vector<128x128xf32>, vector<64x128xf32> -> vector<64x128xf32>
    %12 = arith.truncf %11 : vector<64x128xf32> to vector<64x128xbf16>
    %cst_12 = arith.constant dense<0.000000e+00> : vector<64x128xf32>
    %13 = tpu.matmul %0, %12, %cst_12 {dimension_numbers = #tpu.dot_dimension_numbers<[1], [0], [0], [1], [0, 0, 1, 1], [], []>} : vector<64x64xbf16>, vector<64x128xbf16>, vector<64x128xf32> -> vector<64x128xf32>
    %c0_13 = arith.constant 0 : index
    %c0_14 = arith.constant 0 : index
    %14 = vector.load %arg5[%c0_13, %c0_14] : memref<1x128xf32, #tpu.memory_space<vmem>>, vector<1x128xf32>
    %15 = vector.broadcast %14 : vector<1x128xf32> to vector<64x128xf32>
    %16 = arith.addf %13, %15 : vector<64x128xf32>
    %c0_15 = arith.constant 0 : index
    %c0_16 = arith.constant 0 : index
    %17 = vector.load %arg6[%c0_15, %c0_16] : memref<64x128xf32, #tpu.memory_space<vmem>>, vector<64x128xf32>
    tpu.vector_store %arg6[%c0_15, %c0_16], %16 {strides = array<i32>} : memref<64x128xf32, #tpu.memory_space<vmem>>, vector<64x128xf32>,
    return
  }
}

</mosaic_0001>

<llo_original>
// kernel: tpu_custom_call.1
$region0: #{tpu_custom_call.1}
  #allocation0 [shape = 'u32[]', space=smem, size = 0x4, offset = 0x4, fixed_abs, tag = 'smem constant byte address 0x4 - core index']
  #allocation1 [shape = 'u32[144,128]{1,0:T(1,128)}', space=vmem, size = 0x12000, scoped, tag = 'internal scratch']
  %s0 = inlined_call_operand.vmem [shape: bf16[64,64], index: 0, kind: input, shape index: {}]
  %s1 = inlined_call_operand.vmem [shape: bf16[64,16], index: 1, kind: input, shape index: {}]
  %s2 = inlined_call_operand.hbm [shape: f32[16,128], index: 2, kind: input, shape index: {}]
  %s3 = inlined_call_operand.vmem [shape: f32[1,128], index: 3, kind: input, shape index: {}]
  %s4 = inlined_call_operand.hbm [shape: f32[128,128], index: 4, kind: input, shape index: {}]
  %s5 = inlined_call_operand.vmem [shape: f32[1,128], index: 5, kind: input, shape index: {}]
  %s6 = inlined_call_operand.hbm [shape: f32[64,128], index: 6, kind: output, shape index: {}]
  %s7 = sld [smem:[#allocation0]]
  $region42: #{tpu_custom_call.1} parent=0
    _
  %s9 = ssub.s32 1, %s7
  %s10 = scalar_select 0, %s9, %s7
  $region1: #{tpu_custom_call.1} parent=0
    #allocation2 [shape = 'u8[8192]{0}', space=vmem, size = 0x2000, scoped, tag = 'input window, operand 2, single buffered']
    #allocation3 [shape = 's32[1]{0}', space=sflag, size = 0x4, scoped, tag = 'scoped memory for tpu_custom_call.1']
    #allocation4 [shape = 's32[1]{0}', space=sflag, size = 0x4, scoped, tag = 'scoped memory for tpu_custom_call.1']
    #allocation5 [shape = 'u8[65536]{0}', space=vmem, size = 0x10000, scoped, tag = 'input window, operand 4, single buffered']
    #allocation6 [shape = 's32[1]{0}', space=sflag, size = 0x4, scoped, tag = 'scoped memory for tpu_custom_call.1']
    #allocation7 [shape = 'u8[32768]{0}', space=vmem, size = 0x8000, scoped, tag = 'output window, operand 0, single buffered']
    %11 = vsyncpa [#allocation3], 0
    %12 = vsyncpa [#allocation6], 0
    %13 = vsyncpa [#allocation4], 0
    // Predicated region
    $region2: #{tpu_custom_call.1} parent=1 // pred_check
      _
    $region3: #{tpu_custom_call.1} parent=1 // pred_check_branch
      %15 = sbr.rel (0) target = $region5
    $region4: #{tpu_custom_call.1} parent=1 // pred_region
      _
    $region5: #{tpu_custom_call.1} parent=1 // pred_fallthru
      _
    // Predicated region
    $region6: #{tpu_custom_call.1} parent=1 // pred_check
      _
    $region7: #{tpu_custom_call.1} parent=1 // pred_check_branch
      %17 = sbr.rel (0) target = $region9
    $region8: #{tpu_custom_call.1} parent=1 // pred_region
      _
    $region9: #{tpu_custom_call.1} parent=1 // pred_fallthru
      _
    // Predicated region
    $region10: #{tpu_custom_call.1} parent=1 // pred_check
      _
    $region11: #{tpu_custom_call.1} parent=1 // pred_check_branch
      %19 = sbr.rel (0) target = $region13
    $region12: #{tpu_custom_call.1} parent=1 // pred_region
      %s21 = ssub.s32 256, 256
      %22 = vsyncadd [#allocation3], %s21
      %s23 = sshll.u32 [#allocation2], 4
      %s24 = int_to_ptr.vmem [resolvable:$true] %s23
      %29 = dma.hbm_to_vmem [thread:$0]  %s2, 256, %s24, [#allocation3], 128, 128, 8
    $region13: #{tpu_custom_call.1} parent=1 // pred_fallthru
      _
    // Predicated region
    $region14: #{tpu_custom_call.1} parent=1 // pred_check
      _
    $region15: #{tpu_custom_call.1} parent=1 // pred_check_branch
      %31 = sbr.rel (0) target = $region17
    $region16: #{tpu_custom_call.1} parent=1 // pred_region
      _
    $region17: #{tpu_custom_call.1} parent=1 // pred_fallthru
      _
    // Predicated region
    $region18: #{tpu_custom_call.1} parent=1 // pred_check
      _
    $region19: #{tpu_custom_call.1} parent=1 // pred_check_branch
      %33 = sbr.rel (0) target = $region21
    $region20: #{tpu_custom_call.1} parent=1 // pred_region
      %s35 = ssub.s32 2048, 2048
      %36 = vsyncadd [#allocation6], %s35
      %s37 = sshll.u32 [#allocation5], 4
      %s38 = int_to_ptr.vmem [resolvable:$true] %s37
      %43 = dma.hbm_to_vmem [thread:$0]  %s4, 2048, %s38, [#allocation6], 128, 128, 8
    $region21: #{tpu_custom_call.1} parent=1 // pred_fallthru
      _
    // Predicated region
    $region22: #{tpu_custom_call.1} parent=1 // pred_check
      _
    $region23: #{tpu_custom_call.1} parent=1 // pred_check_branch
      %45 = sbr.rel (0) target = $region25
    $region24: #{tpu_custom_call.1} parent=1 // pred_region
      _
    $region25: #{tpu_custom_call.1} parent=1 // pred_fallthru
      _
    // Predicated region
    $region26: #{tpu_custom_call.1} parent=1 // pred_check
      _
    $region27: #{tpu_custom_call.1} parent=1 // pred_check_branch
      %47 = sbr.rel (0) target = $region29
    $region28: #{tpu_custom_call.1} parent=1 // pred_region
      %48 = dma.done [#allocation3], 256
    $region29: #{tpu_custom_call.1} parent=1 // pred_fallthru
      _
    // Predicated region
    $region30: #{tpu_custom_call.1} parent=1 // pred_check
      _
    $region31: #{tpu_custom_call.1} parent=1 // pred_check_branch
      %50 = sbr.rel (0) target = $region33
    $region32: #{tpu_custom_call.1} parent=1 // pred_region
      %51 = dma.done [#allocation6], 2048
    $region33: #{tpu_custom_call.1} parent=1 // pred_fallthru
      _
    %v53 = vld [vmem:[%s0] sm:$0xf]
    %v54 = vld [vmem:[%s0 + $0x4] sm:$0xf]
    %v55 = vld [vmem:[%s0 + $0x8] sm:$0xf]
    %v56 = vld [vmem:[%s0 + $0xc] sm:$0xf]
    %v57 = vld [vmem:[%s0 + $0x10] sm:$0xf]
    %v58 = vld [vmem:[%s0 + $0x14] sm:$0xf]
    %v59 = vld [vmem:[%s0 + $0x18] sm:$0xf]
    %v60 = vld [vmem:[%s0 + $0x1c] sm:$0xf]
    %v61 = vld [vmem:[%s1] sm:$0xf]
    %v62 = vld [vmem:[%s1 + $0x4] sm:$0xf]
    %v63 = vld [vmem:[%s1 + $0x8] sm:$0xf]
    %v64 = vld [vmem:[%s1 + $0xc] sm:$0xf]
    %v65 = vld [vmem:[%s1 + $0x10] sm:$0xf]
    %v66 = vld [vmem:[%s1 + $0x14] sm:$0xf]
    %v67 = vld [vmem:[%s1 + $0x18] sm:$0xf]
    %v68 = vld [vmem:[%s1 + $0x1c] sm:$0xf]
    %v77 = vunpack.c.l.b16 %v53
    %v78 = vunpack.c.l.b16 %v54
    %v79 = vunpack.c.l.b16 %v55
    %v80 = vunpack.c.l.b16 %v56
    %v81 = vunpack.c.l.b16 %v57
    %v82 = vunpack.c.l.b16 %v58
    %v83 = vunpack.c.l.b16 %v59
    %v84 = vunpack.c.l.b16 %v60
    %v85 = vpack.c.b16 %v78, %v77
    %v86 = vpack.c.b16 %v80, %v79
    %v87 = vpack.c.b16 %v82, %v81
    %v88 = vpack.c.b16 %v84, %v83
    %v97 = vunpack.c.l.b16 %v61
    %v98 = vunpack.c.l.b16 %v62
    %v99 = vunpack.c.l.b16 %v63
    %v100 = vunpack.c.l.b16 %v64
    %v101 = vunpack.c.l.b16 %v65
    %v102 = vunpack.c.l.b16 %v66
    %v103 = vunpack.c.l.b16 %v67
    %v104 = vunpack.c.l.b16 %v68
    %v105 = vpack.c.b16 %v98, %v97
    %v106 = vpack.c.b16 %v100, %v99
    %v107 = vpack.c.b16 %v102, %v101
    %v108 = vpack.c.b16 %v104, %v103
    %vm113 = vcmask 523264
    %v115 = vsel %vm113, %v85, 0
    %v118 = vsel %vm113, %v86, 0
    %v121 = vsel %vm113, %v87, 0
    %v124 = vsel %vm113, %v88, 0
    %126 = vmatprep.subr.bf16.mxu0 0
    %127 = vmatpush1.bf16.msra.mxu0 %v105
    %128 = vmatprep.subr.bf16.mxu0 0
    %129 = vmatpush1.bf16.msra.mxu0 %v106
    %130 = vmatprep.subr.bf16.mxu0 0
    %131 = vmatpush1.bf16.msra.mxu0 %v107
    %132 = vmatprep.subr.bf16.mxu0 0
    %133 = vmatpush1.bf16.msra.mxu0 %v108
    %134 = vmatprep.subr.bf16.mxu0 0
    %135 = vmatpush1.bf16.msra.mxu0 0
    %136 = vmatprep.subr.bf16.mxu0 0
    %137 = vmatpush1.bf16.msra.mxu0 0
    %138 = vmatprep.subr.bf16.mxu0 0
    %139 = vmatpush1.bf16.msra.mxu0 0
    %140 = vmatprep.subr.bf16.mxu0 0
    %141 = vmatpush1.bf16.msra.mxu0 0
    %142 = vmatprep.subr.bf16.mxu0 0
    %143 = vmatpush1.bf16.msra.mxu0 0
    %144 = vmatprep.subr.bf16.mxu0 0
    %145 = vmatpush1.bf16.msra.mxu0 0
    %146 = vmatprep.subr.bf16.mxu0 0
    %147 = vmatpush1.bf16.msra.mxu0 0
    %148 = vmatprep.subr.bf16.mxu0 0
    %149 = vmatpush1.bf16.msra.mxu0 0
    %150 = vmatprep.subr.bf16.mxu0 0
    %151 = vmatpush1.bf16.msra.mxu0 0
    %152 = vmatprep.subr.bf16.mxu0 0
    %153 = vmatpush1.bf16.msra.mxu0 0
    %154 = vmatprep.subr.bf16.mxu0 0
    %155 = vmatpush1.bf16.msra.mxu0 0
    %156 = vmatprep.subr.bf16.mxu0 0
    %157 = vmatpush1.bf16.msra.mxu0 0
    %158 = vmatprep.mubr.bf16.mxu0 0
    %159 = vmatmul.mubr.bf16.gmra.mrb[0].mxu0 %v115
    %v160 = vpop.f32.mrb[0].mxu0
    %v161 = vadd.f32 0.0, %v160
    %v162 = vpop.f32.mrb[0].mxu0
    %v163 = vpop.f32.mrb[0].mxu0
    %v164 = vadd.f32 0.0, %v163
    %v165 = vpop.f32.mrb[0].mxu0
    %166 = vmatprep.mubr.bf16.mxu0 0
    %167 = vmatmul.mubr.bf16.gmra.mrb[0].mxu0 %v118
    %v168 = vpop.f32.mrb[0].mxu0
    %v169 = vadd.f32 0.0, %v168
    %v170 = vpop.f32.mrb[0].mxu0
    %v171 = vpop.f32.mrb[0].mxu0
    %v172 = vadd.f32 0.0, %v171
    %v173 = vpop.f32.mrb[0].mxu0
    %174 = vmatprep.mubr.bf16.mxu0 0
    %175 = vmatmul.mubr.bf16.gmra.mrb[0].mxu0 %v121
    %v176 = vpop.f32.mrb[0].mxu0
    %v177 = vadd.f32 0.0, %v176
    %v178 = vpop.f32.mrb[0].mxu0
    %v179 = vpop.f32.mrb[0].mxu0
    %v180 = vadd.f32 0.0, %v179
    %v181 = vpop.f32.mrb[0].mxu0
    %182 = vmatprep.mubr.bf16.mxu0 0
    %183 = vmatmul.mubr.bf16.gmra.mrb[0].mxu0 %v124
    %v184 = vpop.f32.mrb[0].mxu0
    %v185 = vadd.f32 0.0, %v184
    %v186 = vpop.f32.mrb[0].mxu0
    %v187 = vpop.f32.mrb[0].mxu0
    %v188 = vadd.f32 0.0, %v187
    %v189 = vpop.f32.mrb[0].mxu0
    %190 = vdwg.mxu0
    %v191 = vld [vmem:[#allocation2] sm:$0xff]
    %v192 = vld [vmem:[#allocation2 + $0x8] sm:$0xff]
    %v193 = vld [vmem:[%s3] sm:$0x1]
    %v195 = vlaneseq
    %v196 = vshrl.u32 %v195, 7
    %v197 = vsub.s32 0, %v196
    %v198 = vrot.slane %v193, %v197
    %vm200 = vcmask 130048
    %v202 = vsel %vm200, %v161, 0
    %v205 = vsel %vm200, %v164, 0
    %v208 = vsel %vm200, %v169, 0
    %v211 = vsel %vm200, %v172, 0
    %v214 = vsel %vm200, %v177, 0
    %v217 = vsel %vm200, %v180, 0
    %v220 = vsel %vm200, %v185, 0
    %v223 = vsel %vm200, %v188, 0
    %225 = vmatprep.subr.mxu0 0.0
    %226 = vmatpush1.msra.mxu0 %v191
    %227 = vmatprep.subr.mxu0 0.0
    %228 = vmatpush1.msra.mxu0 %v192
    %229 = vmatprep.subr.mxu0 0.0
    %230 = vmatpush1.msra.mxu0 0.0
    %231 = vmatprep.subr.mxu0 0.0
    %232 = vmatpush1.msra.mxu0 0.0
    %233 = vmatprep.subr.mxu0 0.0
    %234 = vmatpush1.msra.mxu0 0.0
    %235 = vmatprep.subr.mxu0 0.0
    %236 = vmatpush1.msra.mxu0 0.0
    %237 = vmatprep.subr.mxu0 0.0
    %238 = vmatpush1.msra.mxu0 0.0
    %239 = vmatprep.subr.mxu0 0.0
    %240 = vmatpush1.msra.mxu0 0.0
    %241 = vmatprep.subr.mxu0 0.0
    %242 = vmatpush1.msra.mxu0 0.0
    %243 = vmatprep.subr.mxu0 0.0
    %244 = vmatpush1.msra.mxu0 0.0
    %245 = vmatprep.subr.mxu0 0.0
    %246 = vmatpush1.msra.mxu0 0.0
    %247 = vmatprep.subr.mxu0 0.0
    %248 = vmatpush1.msra.mxu0 0.0
    %249 = vmatprep.subr.mxu0 0.0
    %250 = vmatpush1.msra.mxu0 0.0
    %251 = vmatprep.subr.mxu0 0.0
    %252 = vmatpush1.msra.mxu0 0.0
    %253 = vmatprep.subr.mxu0 0.0
    %254 = vmatpush1.msra.mxu0 0.0
    %255 = vmatprep.subr.mxu0 0.0
    %256 = vmatpush1.msra.mxu0 0.0
    %257 = vmatprep.subr.mxu0 0.0
    %258 = vmatpush1.msra.mxu0 0.0
    %259 = vmatprep.subr.mxu0 0.0
    %260 = vmatpush1.msra.mxu0 0.0
    %261 = vmatprep.subr.mxu0 0.0
    %262 = vmatpush1.msra.mxu0 0.0
    %263 = vmatprep.subr.mxu0 0.0
    %264 = vmatpush1.msra.mxu0 0.0
    %265 = vmatprep.subr.mxu0 0.0
    %266 = vmatpush1.msra.mxu0 0.0
    %267 = vmatprep.subr.mxu0 0.0
    %268 = vmatpush1.msra.mxu0 0.0
    %269 = vmatprep.subr.mxu0 0.0
    %270 = vmatpush1.msra.mxu0 0.0
    %271 = vmatprep.subr.mxu0 0.0
    %272 = vmatpush1.msra.mxu0 0.0
    %273 = vmatprep.subr.mxu0 0.0
    %274 = vmatpush1.msra.mxu0 0.0
    %275 = vmatprep.subr.mxu0 0.0
    %276 = vmatpush1.msra.mxu0 0.0
    %277 = vmatprep.subr.mxu0 0.0
    %278 = vmatpush1.msra.mxu0 0.0
    %279 = vmatprep.subr.mxu0 0.0
    %280 = vmatpush1.msra.mxu0 0.0
    %281 = vmatprep.subr.mxu0 0.0
    %282 = vmatpush1.msra.mxu0 0.0
    %283 = vmatprep.subr.mxu0 0.0
    %284 = vmatpush1.msra.mxu0 0.0
    %285 = vmatprep.subr.mxu0 0.0
    %286 = vmatpush1.msra.mxu0 0.0
    %287 = vmatprep.subr.mxu0 0.0
    %288 = vmatpush1.msra.mxu0 0.0
    %289 = vmatprep.mubr.f32.mxu0 0.0
    %290 = vmatmul.mubr.f32.gmra.mrb[0].mxu0 %v202
    %v291 = vpop.f32.mrb[0].mxu0
    %v292 = vadd.f32 %v198, %v291
    %v293 = vpop.f32.mrb[0].mxu0
    %294 = vmatprep.mubr.f32.mxu0 0.0
    %295 = vmatmul.mubr.f32.gmra.mrb[0].mxu0 %v205
    %v296 = vpop.f32.mrb[0].mxu0
    %v297 = vadd.f32 %v198, %v296
    %v298 = vpop.f32.mrb[0].mxu0
    %299 = vmatprep.mubr.f32.mxu0 0.0
    %300 = vmatmul.mubr.f32.gmra.mrb[0].mxu0 %v208
    %v301 = vpop.f32.mrb[0].mxu0
    %v302 = vadd.f32 %v198, %v301
    %v303 = vpop.f32.mrb[0].mxu0
    %304 = vmatprep.mubr.f32.mxu0 0.0
    %305 = vmatmul.mubr.f32.gmra.mrb[0].mxu0 %v211
    %v306 = vpop.f32.mrb[0].mxu0
    %v307 = vadd.f32 %v198, %v306
    %v308 = vpop.f32.mrb[0].mxu0
    %309 = vmatprep.mubr.f32.mxu0 0.0
    %310 = vmatmul.mubr.f32.gmra.mrb[0].mxu0 %v214
    %v311 = vpop.f32.mrb[0].mxu0
    %v312 = vadd.f32 %v198, %v311
    %v313 = vpop.f32.mrb[0].mxu0
    %314 = vmatprep.mubr.f32.mxu0 0.0
    %315 = vmatmul.mubr.f32.gmra.mrb[0].mxu0 %v217
    %v316 = vpop.f32.mrb[0].mxu0
    %v317 = vadd.f32 %v198, %v316
    %v318 = vpop.f32.mrb[0].mxu0
    %319 = vmatprep.mubr.f32.mxu0 0.0
    %320 = vmatmul.mubr.f32.gmra.mrb[0].mxu0 %v220
    %v321 = vpop.f32.mrb[0].mxu0
    %v322 = vadd.f32 %v198, %v321
    %v323 = vpop.f32.mrb[0].mxu0
    %324 = vmatprep.mubr.f32.mxu0 0.0
    %325 = vmatmul.mubr.f32.gmra.mrb[0].mxu0 %v223
    %v326 = vpop.f32.mrb[0].mxu0
    %v327 = vadd.f32 %v198, %v326
    %v328 = vpop.f32.mrb[0].mxu0
    %329 = vdwg.mxu0
    %v330 = vmax.f32 %v292, 0.0
    %v331 = vmax.f32 %v297, 0.0
    %v332 = vmax.f32 %v302, 0.0
    %v333 = vmax.f32 %v307, 0.0
    %v334 = vmax.f32 %v312, 0.0
    %v335 = vmax.f32 %v317, 0.0
    %v336 = vmax.f32 %v322, 0.0
    %v337 = vmax.f32 %v327, 0.0
    %v338 = vld [vmem:[#allocation5] sm:$0xff]
    %v339 = vld [vmem:[#allocation5 + $0x8] sm:$0xff]
    %v340 = vld [vmem:[#allocation5 + $0x10] sm:$0xff]
    %v341 = vld [vmem:[#allocation5 + $0x18] sm:$0xff]
    %v342 = vld [vmem:[#allocation5 + $0x20] sm:$0xff]
    %v343 = vld [vmem:[#allocation5 + $0x28] sm:$0xff]
    %v344 = vld [vmem:[#allocation5 + $0x30] sm:$0xff]
    %v345 = vld [vmem:[#allocation5 + $0x38] sm:$0xff]
    %v346 = vld [vmem:[#allocation5 + $0x40] sm:$0xff]
    %v347 = vld [vmem:[#allocation5 + $0x48] sm:$0xff]
    %v348 = vld [vmem:[#allocation5 + $0x50] sm:$0xff]
    %v349 = vld [vmem:[#allocation5 + $0x58] sm:$0xff]
    %v350 = vld [vmem:[#allocation5 + $0x60] sm:$0xff]
    %v351 = vld [vmem:[#allocation5 + $0x68] sm:$0xff]
    %v352 = vld [vmem:[#allocation5 + $0x70] sm:$0xff]
    %v353 = vld [vmem:[#allocation5 + $0x78] sm:$0xff]
    %354 = vmatprep.subr.mxu0 0.0
    %355 = vmatpush1.msra.mxu0 %v338
    %356 = vmatprep.subr.mxu0 0.0
    %357 = vmatpush1.msra.mxu0 %v339
    %358 = vmatprep.subr.mxu0 0.0
    %359 = vmatpush1.msra.mxu0 %v340
    %360 = vmatprep.subr.mxu0 0.0
    %361 = vmatpush1.msra.mxu0 %v341
    %362 = vmatprep.subr.mxu0 0.0
    %363 = vmatpush1.msra.mxu0 %v342
    %364 = vmatprep.subr.mxu0 0.0
    %365 = vmatpush1.msra.mxu0 %v343
    %366 = vmatprep.subr.mxu0 0.0
    %367 = vmatpush1.msra.mxu0 %v344
    %368 = vmatprep.subr.mxu0 0.0
    %369 = vmatpush1.msra.mxu0 %v345
    %370 = vmatprep.subr.mxu0 0.0
    %371 = vmatpush1.msra.mxu0 %v346
    %372 = vmatprep.subr.mxu0 0.0
    %373 = vmatpush1.msra.mxu0 %v347
    %374 = vmatprep.subr.mxu0 0.0
    %375 = vmatpush1.msra.mxu0 %v348
    %376 = vmatprep.subr.mxu0 0.0
    %377 = vmatpush1.msra.mxu0 %v349
    %378 = vmatprep.subr.mxu0 0.0
    %379 = vmatpush1.msra.mxu0 %v350
    %380 = vmatprep.subr.mxu0 0.0
    %381 = vmatpush1.msra.mxu0 %v351
    %382 = vmatprep.subr.mxu0 0.0
    %383 = vmatpush1.msra.mxu0 %v352
    %384 = vmatprep.subr.mxu0 0.0
    %385 = vmatpush1.msra.mxu0 %v353
    %386 = vmatprep.subr.mxu0 0.0
    %387 = vmatpush1.msra.mxu0 0.0
    %388 = vmatprep.subr.mxu0 0.0
    %389 = vmatpush1.msra.mxu0 0.0
    %390 = vmatprep.subr.mxu0 0.0
    %391 = vmatpush1.msra.mxu0 0.0
    %392 = vmatprep.subr.mxu0 0.0
    %393 = vmatpush1.msra.mxu0 0.0
    %394 = vmatprep.subr.mxu0 0.0
    %395 = vmatpush1.msra.mxu0 0.0
    %396 = vmatprep.subr.mxu0 0.0
    %397 = vmatpush1.msra.mxu0 0.0
    %398 = vmatprep.subr.mxu0 0.0
    %399 = vmatpush1.msra.mxu0 0.0
    %400 = vmatprep.subr.mxu0 0.0
    %401 = vmatpush1.msra.mxu0 0.0
    %402 = vmatprep.subr.mxu0 0.0
    %403 = vmatpush1.msra.mxu0 0.0
    %404 = vmatprep.subr.mxu0 0.0
    %405 = vmatpush1.msra.mxu0 0.0
    %406 = vmatprep.subr.mxu0 0.0
    %407 = vmatpush1.msra.mxu0 0.0
    %408 = vmatprep.subr.mxu0 0.0
    %409 = vmatpush1.msra.mxu0 0.0
    %410 = vmatprep.subr.mxu0 0.0
    %411 = vmatpush1.msra.mxu0 0.0
    %412 = vmatprep.subr.mxu0 0.0
    %413 = vmatpush1.msra.mxu0 0.0
    %414 = vmatprep.subr.mxu0 0.0
    %415 = vmatpush1.msra.mxu0 0.0
    %416 = vmatprep.subr.mxu0 0.0
    %417 = vmatpush1.msra.mxu0 0.0
    %418 = vmatprep.mubr.f32.mxu0 0.0
    %419 = vmatmul.mubr.f32.gmra.mrb[0].mxu0 %v330
    %v420 = vpop.f32.mrb[0].mxu0
    %v421 = vadd.f32 0.0, %v420
    %v422 = vpop.f32.mrb[0].mxu0
    %423 = vmatprep.mubr.f32.mxu0 0.0
    %424 = vmatmul.mubr.f32.gmra.mrb[0].mxu0 %v331
    %v425 = vpop.f32.mrb[0].mxu0
    %v426 = vadd.f32 0.0, %v425
    %v427 = vpop.f32.mrb[0].mxu0
    %428 = vmatprep.mubr.f32.mxu0 0.0
    %429 = vmatmul.mubr.f32.gmra.mrb[0].mxu0 %v332
    %v430 = vpop.f32.mrb[0].mxu0
    %v431 = vadd.f32 0.0, %v430
    %v432 = vpop.f32.mrb[0].mxu0
    %433 = vmatprep.mubr.f32.mxu0 0.0
    %434 = vmatmul.mubr.f32.gmra.mrb[0].mxu0 %v333
    %v435 = vpop.f32.mrb[0].mxu0
    %v436 = vadd.f32 0.0, %v435
    %v437 = vpop.f32.mrb[0].mxu0
    %438 = vmatprep.mubr.f32.mxu0 0.0
    %439 = vmatmul.mubr.f32.gmra.mrb[0].mxu0 %v334
    %v440 = vpop.f32.mrb[0].mxu0
    %v441 = vadd.f32 0.0, %v440
    %v442 = vpop.f32.mrb[0].mxu0
    %443 = vmatprep.mubr.f32.mxu0 0.0
    %444 = vmatmul.mubr.f32.gmra.mrb[0].mxu0 %v335
    %v445 = vpop.f32.mrb[0].mxu0
    %v446 = vadd.f32 0.0, %v445
    %v447 = vpop.f32.mrb[0].mxu0
    %448 = vmatprep.mubr.f32.mxu0 0.0
    %449 = vmatmul.mubr.f32.gmra.mrb[0].mxu0 %v336
    %v450 = vpop.f32.mrb[0].mxu0
    %v451 = vadd.f32 0.0, %v450
    %v452 = vpop.f32.mrb[0].mxu0
    %453 = vmatprep.mubr.f32.mxu0 0.0
    %454 = vmatmul.mubr.f32.gmra.mrb[0].mxu0 %v337
    %v455 = vpop.f32.mrb[0].mxu0
    %v456 = vadd.f32 0.0, %v455
    %v457 = vpop.f32.mrb[0].mxu0
    %458 = vdwg.mxu0
    %v459 = vpack.c.bf16 %v426, %v421
    %v460 = vpack.c.bf16 %v436, %v431
    %v461 = vpack.c.bf16 %v446, %v441
    %v462 = vpack.c.bf16 %v456, %v451
    %v463 = vld [vmem:[%s5] sm:$0x1]
    %v465 = vlaneseq
    %v466 = vshrl.u32 %v465, 7
    %v467 = vsub.s32 0, %v466
    %v468 = vrot.slane %v463, %v467
    %470 = vmatprep.subr.bf16.mxu0 0
    %471 = vmatpush1.bf16.msra.mxu0 %v459
    %472 = vmatprep.subr.bf16.mxu0 0
    %473 = vmatpush1.bf16.msra.mxu0 %v460
    %474 = vmatprep.subr.bf16.mxu0 0
    %475 = vmatpush1.bf16.msra.mxu0 %v461
    %476 = vmatprep.subr.bf16.mxu0 0
    %477 = vmatpush1.bf16.msra.mxu0 %v462
    %478 = vmatprep.subr.bf16.mxu0 0
    %479 = vmatpush1.bf16.msra.mxu0 0
    %480 = vmatprep.subr.bf16.mxu0 0
    %481 = vmatpush1.bf16.msra.mxu0 0
    %482 = vmatprep.subr.bf16.mxu0 0
    %483 = vmatpush1.bf16.msra.mxu0 0
    %484 = vmatprep.subr.bf16.mxu0 0
    %485 = vmatpush1.bf16.msra.mxu0 0
    %486 = vmatprep.subr.bf16.mxu0 0
    %487 = vmatpush1.bf16.msra.mxu0 0
    %488 = vmatprep.subr.bf16.mxu0 0
    %489 = vmatpush1.bf16.msra.mxu0 0
    %490 = vmatprep.subr.bf16.mxu0 0
    %491 = vmatpush1.bf16.msra.mxu0 0
    %492 = vmatprep.subr.bf16.mxu0 0
    %493 = vmatpush1.bf16.msra.mxu0 0
    %494 = vmatprep.subr.bf16.mxu0 0
    %495 = vmatpush1.bf16.msra.mxu0 0
    %496 = vmatprep.subr.bf16.mxu0 0
    %497 = vmatpush1.bf16.msra.mxu0 0
    %498 = vmatprep.subr.bf16.mxu0 0
    %499 = vmatpush1.bf16.msra.mxu0 0
    %500 = vmatprep.subr.bf16.mxu0 0
    %501 = vmatpush1.bf16.msra.mxu0 0
    %502 = vmatprep.mubr.bf16.mxu0 0
    %503 = vmatmul.mubr.bf16.gmra.mrb[0].mxu0 %v115
    %v504 = vpop.f32.mrb[0].mxu0
    %v505 = vadd.f32 %v468, %v504
    %v506 = vpop.f32.mrb[0].mxu0
    %v507 = vpop.f32.mrb[0].mxu0
    %v508 = vadd.f32 %v468, %v507
    %v509 = vpop.f32.mrb[0].mxu0
    %510 = vmatprep.mubr.bf16.mxu0 0
    %511 = vmatmul.mubr.bf16.gmra.mrb[0].mxu0 %v118
    %v512 = vpop.f32.mrb[0].mxu0
    %v513 = vadd.f32 %v468, %v512
    %v514 = vpop.f32.mrb[0].mxu0
    %v515 = vpop.f32.mrb[0].mxu0
    %v516 = vadd.f32 %v468, %v515
    %v517 = vpop.f32.mrb[0].mxu0
    %518 = vmatprep.mubr.bf16.mxu0 0
    %519 = vmatmul.mubr.bf16.gmra.mrb[0].mxu0 %v121
    %v520 = vpop.f32.mrb[0].mxu0
    %v521 = vadd.f32 %v468, %v520
    %v522 = vpop.f32.mrb[0].mxu0
    %v523 = vpop.f32.mrb[0].mxu0
    %v524 = vadd.f32 %v468, %v523
    %v525 = vpop.f32.mrb[0].mxu0
    %526 = vmatprep.mubr.bf16.mxu0 0
    %527 = vmatmul.mubr.bf16.gmra.mrb[0].mxu0 %v124
    %v528 = vpop.f32.mrb[0].mxu0
    %v529 = vadd.f32 %v468, %v528
    %v530 = vpop.f32.mrb[0].mxu0
    %v531 = vpop.f32.mrb[0].mxu0
    %v532 = vadd.f32 %v468, %v531
    %v533 = vpop.f32.mrb[0].mxu0
    %534 = vdwg.mxu0
    %535 = vst [vmem:[#allocation7] sm:$0xff] %v505
    %536 = vst [vmem:[#allocation7 + $0x8] sm:$0xff] %v508
    %537 = vst [vmem:[#allocation7 + $0x10] sm:$0xff] %v513
    %538 = vst [vmem:[#allocation7 + $0x18] sm:$0xff] %v516
    %539 = vst [vmem:[#allocation7 + $0x20] sm:$0xff] %v521
    %540 = vst [vmem:[#allocation7 + $0x28] sm:$0xff] %v524
    %541 = vst [vmem:[#allocation7 + $0x30] sm:$0xff] %v529
    %542 = vst [vmem:[#allocation7 + $0x38] sm:$0xff] %v532
    // Predicated region
    $region34: #{tpu_custom_call.1} parent=1 // pred_check
      _
    $region35: #{tpu_custom_call.1} parent=1 // pred_check_branch
      %544 = sbr.rel (0) target = $region37
    $region36: #{tpu_custom_call.1} parent=1 // pred_region
      %s546 = ssub.s32 1024, 1024
      %547 = vsyncadd [#allocation4], %s546
      %s548 = sshll.u32 [#allocation7], 4
      %s549 = int_to_ptr.vmem [resolvable:$true] %s548
      %554 = dma.vmem_to_hbm [thread:$0]  %s549, 1024, %s6, [#allocation4], 128, 128, 8
    $region37: #{tpu_custom_call.1} parent=1 // pred_fallthru
      _
    // Predicated region
    $region38: #{tpu_custom_call.1} parent=1 // pred_check
      _
    $region39: #{tpu_custom_call.1} parent=1 // pred_check_branch
      %556 = sbr.rel (0) target = $region41
    $region40: #{tpu_custom_call.1} parent=1 // pred_region
      %557 = dma.done [#allocation4], 1024
    $region41: #{tpu_custom_call.1} parent=1 // pred_fallthru
      _
    %558 = vsyncpa [#allocation3], 1
    %559 = vsyncpa [#allocation6], 1
    %560 = vsyncpa [#allocation4], 1

</llo_original>
